<compile_context>
chip_gen: v5e
topology: v5e:2x2
jax: 0.10.0
libtpu: 0.0.40
codegen_flags: <defaults>
</compile_context>

<pallas_src>
import jax
import jax.numpy as jnp
from jax.experimental import pallas as pl
from jax.experimental.pallas import tpu as pltpu

B, C, H, W = 2, 3, 16, 16
HW = H * W
CHW = C * HW                      # 768
POSE_IN = 2 * CHW                 # pose encoder eats cat([pre, cur], dim=1) -> 6 channels
N_SCALES = 2                      # synthetic depth_net emits 2 depth maps


# ----------------------------- fused Pallas kernel ------------------------- #

def _fused_kernel(pre_ref, cur_ref, nxt_ref, wa_ref, wb_ref, pb_ref,
                  dw_ref, db_ref, rpose_ref, npose_ref, depth_ref):
    """Both pose transforms + all depth scales in one launch.

    pre/cur/nxt : VMEM (B, CHW) f32 raw images (normalization folded into weights)
    wa/wb       : VMEM (CHW, 6) bf16 folded pose-weight halves (pre/cur part, cur/nxt part)
    pb          : VMEM (1, 6) f32 folded pose bias (0.1 and per-index 0.1/0.5 included)
    dw          : SMEM (N_SCALES*C,) f32 folded depth 1x1-conv weights (flat)
    db          : SMEM (N_SCALES,)   f32 folded depth biases
    rpose_ref   : VMEM (B, 6) refers_pose
    npose_ref   : VMEM (B, 6) next_pose
    depth_ref   : VMEM (N_SCALES, B, HW), scales already in reversed order
    """
    wa = wa_ref[...]
    wb = wb_ref[...]
    pb = pb_ref[...]

    cur = cur_ref[...]                                   # keep f32 copy for depth head
    pre_b = pre_ref[...].astype(jnp.bfloat16)
    cur_b = cur.astype(jnp.bfloat16)
    nxt_b = nxt_ref[...].astype(jnp.bfloat16)

    # ---- Pose: four direct bf16 MXU dots, f32 accumulate ---------------------
    rpose_ref[...] = (jnp.dot(pre_b, wa, preferred_element_type=jnp.float32)
                      + jnp.dot(cur_b, wb, preferred_element_type=jnp.float32)
                      + pb)
    npose_ref[...] = (jnp.dot(cur_b, wa, preferred_element_type=jnp.float32)
                      + jnp.dot(nxt_b, wb, preferred_element_type=jnp.float32)
                      + pb)

    # ---- Depth: 1x1 conv over channels + sigmoid, all scales -----------------
    # Hoist SMEM scalar reads so scalar->vreg broadcasts co-issue with VPU FMAs.
    dw = [dw_ref[i] for i in range(N_SCALES * C)]
    db = [db_ref[s] for s in range(N_SCALES)]
    chans = [cur[:, c * HW:(c + 1) * HW] for c in range(C)]   # (B, HW), lane-aligned slices
    for i, s in enumerate(reversed(range(N_SCALES))):          # reversed => depth_maps[::-1]
        acc = db[s] + dw[s * C + 0] * chans[0]
        for c in range(1, C):
            acc = acc + dw[s * C + c] * chans[c]
        depth_ref[i, :, :] = jax.nn.sigmoid(acc)               # full (B, HW) slab store


# ------------------------------ JAX wrappers ------------------------------- #

def fold_params(params):
    """Fold (x-0.45)/0.225 and the pose scaling constants into weights/biases.

    Done ONCE at init (outside the jitted step). Pose weights returned as bf16.
    """
    pose_w, pose_b = params['pose_w'], params['pose_b']        # (2*CHW, 6), (1, 6)
    depth_w, depth_b = params['depth_w'], params['depth_b']    # (N_SCALES, C), (N_SCALES,)
    # 0.1 * pose, then *0.1 on cols 0..2 and *0.5 on the last col (non-overlapping).
    col_scale = 0.1 * jnp.array([0.1, 0.1, 0.1, 1.0, 1.0, 0.5], jnp.float32)
    inv_std = 1.0 / 0.225
    mean_over_std = 0.45 / 0.225                               # == 2.0 exactly
    w_fold = pose_w * (col_scale * inv_std)                    # (2*CHW, 6)
    b_fold = (col_scale * (pose_b.reshape(6)
                           - mean_over_std * jnp.sum(pose_w, axis=0))).reshape(1, 6)
    dw_fold = (depth_w * inv_std).reshape(N_SCALES * C)        # flat 1-D for SMEM
    db_fold = depth_b - mean_over_std * jnp.sum(depth_w, axis=1)
    wa = w_fold[:CHW].astype(jnp.bfloat16)
    wb = w_fold[CHW:].astype(jnp.bfloat16)
    return wa, wb, b_fold, dw_fold, db_fold


_COST = pl.CostEstimate(
    flops=4 * 2 * B * CHW * 6 + 2 * N_SCALES * B * HW * C,     # 4 pose dots + depth FMAs
    transcendentals=N_SCALES * B * HW,                         # sigmoid exps
    bytes_accessed=(3 * B * CHW * 4                            # images (f32)
                    + 2 * CHW * 6 * 2                          # bf16 pose weights
                    + 6 * 4 + (N_SCALES * C + N_SCALES) * 4    # biases / depth weights
                    + 2 * B * 6 * 4 + N_SCALES * B * HW * 4),  # outputs
)


@jax.jit
def mono_depth_stn_forward(pre_image, cur_image, next_image, wa, wb, pb, dw, db):
    pre_f = pre_image.reshape(B, CHW)          # contiguous reshapes: no HBM copy
    cur_f = cur_image.reshape(B, CHW)
    nxt_f = next_image.reshape(B, CHW)

    rpose, npose, depth = pl.pallas_call(
        _fused_kernel,
        out_shape=(jax.ShapeDtypeStruct((B, 6), jnp.float32),
                   jax.ShapeDtypeStruct((B, 6), jnp.float32),
                   jax.ShapeDtypeStruct((N_SCALES, B, HW), jnp.float32)),
        in_specs=[pl.BlockSpec(memory_space=pltpu.MemorySpace.VMEM)] * 6
                 + [pl.BlockSpec(memory_space=pltpu.MemorySpace.SMEM)] * 2,
        out_specs=(pl.BlockSpec(memory_space=pltpu.MemorySpace.VMEM),
                   pl.BlockSpec(memory_space=pltpu.MemorySpace.VMEM),
                   pl.BlockSpec(memory_space=pltpu.MemorySpace.VMEM)),
        cost_estimate=_COST,
    )(pre_f, cur_f, nxt_f, wa, wb, pb, dw, db)

    refers_pose = rpose.reshape(B, -1, 6)          # view(B, -1, 6) -> (B, 1, 6)
    next_pose = npose.reshape(B, -1, 6)
    d = depth.reshape(N_SCALES, B, 1, H, W)
    depth_maps = [d[s] for s in range(N_SCALES)]   # already reversed in-kernel
    return depth_maps, refers_pose, next_pose


# --------------------------- pure-JAX reference ---------------------------- #

def _ref_forward(pre, cur, nxt, params):
    norm = lambda x: (x - 0.45) / 0.225

    def pose(a, b_img):
        x = jnp.concatenate([norm(a), norm(b_img)], axis=1).reshape(B, -1)
        t = x @ params['pose_w'] + params['pose_b'][0]
        t = 0.1 * t.reshape(B, -1, 6)
        t = t.at[..., -1].multiply(0.5)
        t = t.at[..., :3].multiply(0.1)
        return t

    def depth(a):
        xn = norm(a).reshape(B, C, HW)
        maps = []
        for s in range(N_SCALES):
            acc = params['depth_b'][s] + jnp.einsum('c,bcx->bx', params['depth_w'][s], xn)
            maps.append(jax.nn.sigmoid(acc).reshape(B, 1, H, W))
        return maps[::-1]

    return depth(cur), pose(pre, cur), pose(cur, nxt)


if __name__ == "__main__":
    key = jax.random.PRNGKey(0)
    k1, k2, k3, k4, k5, k6, k7 = jax.random.split(key, 7)
    pre_image = jax.random.uniform(k1, (B, C, H, W), jnp.float32)
    cur_image = jax.random.uniform(k2, (B, C, H, W), jnp.float32)
    next_image = jax.random.uniform(k3, (B, C, H, W), jnp.float32)

    # Deterministic synthetic parameters (shapes implied by the synthetic heads).
    params = {
        'pose_w': 0.01 * jax.random.normal(k4, (POSE_IN, 6), jnp.float32),
        'pose_b': 0.01 * jax.random.normal(k5, (1, 6), jnp.float32),
        'depth_w': 0.1 * jax.random.normal(k6, (N_SCALES, C), jnp.float32),
        'depth_b': 0.1 * jax.random.normal(k7, (N_SCALES,), jnp.float32),
    }

    # Fold once at init (outside the jitted step).
    wa, wb, pb, dw, db = jax.block_until_ready(fold_params(params))

    out = mono_depth_stn_forward(pre_image, cur_image, next_image, wa, wb, pb, dw, db)
    out = jax.block_until_ready(out)
    depth_maps, refers_pose, next_pose = out

    ref_d, ref_r, ref_n = _ref_forward(pre_image, cur_image, next_image, params)
    assert all(jnp.allclose(a, b, rtol=2e-2, atol=2e-3) for a, b in zip(depth_maps, ref_d))
    assert jnp.allclose(refers_pose, ref_r, rtol=2e-2, atol=2e-3)
    assert jnp.allclose(next_pose, ref_n, rtol=2e-2, atol=2e-3)
    assert refers_pose.shape == (B, 1, 6) and next_pose.shape == (B, 1, 6)
    assert all(dm.shape == (B, 1, H, W) for dm in depth_maps)

    print("KERNEL_OK")
</pallas_src>

<mosaic_0001>
module attributes {stable_mosaic.version = 11 : i64} {
  func.func @_fused_kernel(%arg0: memref<2x768xf32, #tpu.memory_space<vmem>>, %arg1: memref<2x768xf32, #tpu.memory_space<vmem>>, %arg2: memref<2x768xf32, #tpu.memory_space<vmem>>, %arg3: memref<768x6xbf16, #tpu.memory_space<vmem>>, %arg4: memref<768x6xbf16, #tpu.memory_space<vmem>>, %arg5: memref<1x6xf32, #tpu.memory_space<vmem>>, %arg6: memref<6xf32, #tpu.memory_space<smem>>, %arg7: memref<2xf32, #tpu.memory_space<smem>>, %arg8: memref<2x6xf32, #tpu.memory_space<vmem>>, %arg9: memref<2x6xf32, #tpu.memory_space<vmem>>, %arg10: memref<2x2x256xf32, #tpu.memory_space<vmem>>) attributes {dimension_semantics = [], scalar_prefetch = 0 : i64, scratch_operands = 0 : i64, tpu.core_type = #tpu.core_type<tc>} {
    %c0 = arith.constant 0 : index
    %c0_0 = arith.constant 0 : index
    %0 = vector.load %arg3[%c0, %c0_0] : memref<768x6xbf16, #tpu.memory_space<vmem>>, vector<768x6xbf16>
    %c0_1 = arith.constant 0 : index
    %c0_2 = arith.constant 0 : index
    %1 = vector.load %arg4[%c0_1, %c0_2] : memref<768x6xbf16, #tpu.memory_space<vmem>>, vector<768x6xbf16>
    %c0_3 = arith.constant 0 : index
    %c0_4 = arith.constant 0 : index
    %2 = vector.load %arg5[%c0_3, %c0_4] : memref<1x6xf32, #tpu.memory_space<vmem>>, vector<1x6xf32>
    %c0_5 = arith.constant 0 : index
    %c0_6 = arith.constant 0 : index
    %3 = vector.load %arg1[%c0_5, %c0_6] : memref<2x768xf32, #tpu.memory_space<vmem>>, vector<2x768xf32>
    %c0_7 = arith.constant 0 : index
    %c0_8 = arith.constant 0 : index
    %4 = vector.load %arg0[%c0_7, %c0_8] : memref<2x768xf32, #tpu.memory_space<vmem>>, vector<2x768xf32>
    %5 = arith.truncf %4 : vector<2x768xf32> to vector<2x768xbf16>
    %6 = arith.truncf %3 : vector<2x768xf32> to vector<2x768xbf16>
    %c0_9 = arith.constant 0 : index
    %c0_10 = arith.constant 0 : index
    %7 = vector.load %arg2[%c0_9, %c0_10] : memref<2x768xf32, #tpu.memory_space<vmem>>, vector<2x768xf32>
    %8 = arith.truncf %7 : vector<2x768xf32> to vector<2x768xbf16>
    %cst = arith.constant dense<0.000000e+00> : vector<2x6xf32>
    %9 = tpu.matmul %5, %0, %cst {dimension_numbers = #tpu.dot_dimension_numbers<[1], [0], [0], [1], [0, 0, 1, 1], [], []>} : vector<2x768xbf16>, vector<768x6xbf16>, vector<2x6xf32> -> vector<2x6xf32>
    %cst_11 = arith.constant dense<0.000000e+00> : vector<2x6xf32>
    %10 = tpu.matmul %6, %1, %cst_11 {dimension_numbers = #tpu.dot_dimension_numbers<[1], [0], [0], [1], [0, 0, 1, 1], [], []>} : vector<2x768xbf16>, vector<768x6xbf16>, vector<2x6xf32> -> vector<2x6xf32>
    %11 = arith.addf %9, %10 : vector<2x6xf32>
    %12 = vector.broadcast %2 : vector<1x6xf32> to vector<2x6xf32>
    %13 = arith.addf %11, %12 : vector<2x6xf32>
    %c0_12 = arith.constant 0 : index
    %c0_13 = arith.constant 0 : index
    %14 = vector.load %arg8[%c0_12, %c0_13] : memref<2x6xf32, #tpu.memory_space<vmem>>, vector<2x6xf32>
    tpu.vector_store %arg8[%c0_12, %c0_13], %13 {strides = array<i32>} : memref<2x6xf32, #tpu.memory_space<vmem>>, vector<2x6xf32>,
    %cst_14 = arith.constant dense<0.000000e+00> : vector<2x6xf32>
    %15 = tpu.matmul %6, %0, %cst_14 {dimension_numbers = #tpu.dot_dimension_numbers<[1], [0], [0], [1], [0, 0, 1, 1], [], []>} : vector<2x768xbf16>, vector<768x6xbf16>, vector<2x6xf32> -> vector<2x6xf32>
    %cst_15 = arith.constant dense<0.000000e+00> : vector<2x6xf32>
    %16 = tpu.matmul %8, %1, %cst_15 {dimension_numbers = #tpu.dot_dimension_numbers<[1], [0], [0], [1], [0, 0, 1, 1], [], []>} : vector<2x768xbf16>, vector<768x6xbf16>, vector<2x6xf32> -> vector<2x6xf32>
    %17 = arith.addf %15, %16 : vector<2x6xf32>
    %18 = vector.broadcast %2 : vector<1x6xf32> to vector<2x6xf32>
    %19 = arith.addf %17, %18 : vector<2x6xf32>
    %c0_16 = arith.constant 0 : index
    %c0_17 = arith.constant 0 : index
    %20 = vector.load %arg9[%c0_16, %c0_17] : memref<2x6xf32, #tpu.memory_space<vmem>>, vector<2x6xf32>
    tpu.vector_store %arg9[%c0_16, %c0_17], %19 {strides = array<i32>} : memref<2x6xf32, #tpu.memory_space<vmem>>, vector<2x6xf32>,
    %c0_18 = arith.constant 0 : index
    %21 = memref.load %arg6[%c0_18] : memref<6xf32, #tpu.memory_space<smem>>
    %c1 = arith.constant 1 : index
    %22 = memref.load %arg6[%c1] : memref<6xf32, #tpu.memory_space<smem>>
    %c2 = arith.constant 2 : index
    %23 = memref.load %arg6[%c2] : memref<6xf32, #tpu.memory_space<smem>>
    %c3 = arith.constant 3 : index
    %24 = memref.load %arg6[%c3] : memref<6xf32, #tpu.memory_space<smem>>
    %c4 = arith.constant 4 : index
    %25 = memref.load %arg6[%c4] : memref<6xf32, #tpu.memory_space<smem>>
    %c5 = arith.constant 5 : index
    %26 = memref.load %arg6[%c5] : memref<6xf32, #tpu.memory_space<smem>>
    %c0_19 = arith.constant 0 : index
    %27 = memref.load %arg7[%c0_19] : memref<2xf32, #tpu.memory_space<smem>>
    %c1_20 = arith.constant 1 : index
    %28 = memref.load %arg7[%c1_20] : memref<2xf32, #tpu.memory_space<smem>>
    %29 = vector.extract_strided_slice %3 {offsets = [0, 0], sizes = [2, 256], strides = [1, 1]} : vector<2x768xf32> to vector<2x256xf32>
    %30 = vector.extract_strided_slice %3 {offsets = [0, 256], sizes = [2, 256], strides = [1, 1]} : vector<2x768xf32> to vector<2x256xf32>
    %31 = vector.extract_strided_slice %3 {offsets = [0, 512], sizes = [2, 256], strides = [1, 1]} : vector<2x768xf32> to vector<2x256xf32>
    %32 = vector.broadcast %24 : f32 to vector<2x256xf32>
    %33 = arith.mulf %32, %29 : vector<2x256xf32>
    %34 = vector.broadcast %28 : f32 to vector<2x256xf32>
    %35 = arith.addf %34, %33 : vector<2x256xf32>
    %36 = vector.broadcast %25 : f32 to vector<2x256xf32>
    %37 = arith.mulf %36, %30 : vector<2x256xf32>
    %38 = arith.addf %35, %37 : vector<2x256xf32>
    %39 = vector.broadcast %26 : f32 to vector<2x256xf32>
    %40 = arith.mulf %39, %31 : vector<2x256xf32>
    %41 = arith.addf %38, %40 : vector<2x256xf32>
    %42 = arith.negf %41 : vector<2x256xf32>
    %43 = math.exp %42 : vector<2x256xf32>
    %cst_21 = arith.constant 1.000000e+00 : f32
    %44 = vector.broadcast %cst_21 : f32 to vector<2x256xf32>
    %45 = arith.addf %44, %43 : vector<2x256xf32>
    %46 = arith.divf %44, %45 : vector<2x256xf32>
    %c0_22 = arith.constant 0 : index
    %c0_23 = arith.constant 0 : index
    %c0_24 = arith.constant 0 : index
    %47 = vector.load %arg10[%c0_22, %c0_23, %c0_24] : memref<2x2x256xf32, #tpu.memory_space<vmem>>, vector<1x2x256xf32>
    %48 = vector.shape_cast %47 : vector<1x2x256xf32> to vector<2x256xf32>
    %49 = vector.shape_cast %46 : vector<2x256xf32> to vector<1x2x256xf32>
    tpu.vector_store %arg10[%c0_22, %c0_23, %c0_24], %49 {strides = array<i32>} : memref<2x2x256xf32, #tpu.memory_space<vmem>>, vector<1x2x256xf32>,
    %50 = vector.broadcast %21 : f32 to vector<2x256xf32>
    %51 = arith.mulf %50, %29 : vector<2x256xf32>
    %52 = vector.broadcast %27 : f32 to vector<2x256xf32>
    %53 = arith.addf %52, %51 : vector<2x256xf32>
    %54 = vector.broadcast %22 : f32 to vector<2x256xf32>
    %55 = arith.mulf %54, %30 : vector<2x256xf32>
    %56 = arith.addf %53, %55 : vector<2x256xf32>
    %57 = vector.broadcast %23 : f32 to vector<2x256xf32>
    %58 = arith.mulf %57, %31 : vector<2x256xf32>
    %59 = arith.addf %56, %58 : vector<2x256xf32>
    %60 = arith.negf %59 : vector<2x256xf32>
    %61 = math.exp %60 : vector<2x256xf32>
    %cst_25 = arith.constant 1.000000e+00 : f32
    %62 = vector.broadcast %cst_25 : f32 to vector<2x256xf32>
    %63 = arith.addf %62, %61 : vector<2x256xf32>
    %64 = arith.divf %62, %63 : vector<2x256xf32>
    %c1_26 = arith.constant 1 : index
    %c0_27 = arith.constant 0 : index
    %c0_28 = arith.constant 0 : index
    %65 = vector.load %arg10[%c1_26, %c0_27, %c0_28] : memref<2x2x256xf32, #tpu.memory_space<vmem>>, vector<1x2x256xf32>
    %66 = vector.shape_cast %65 : vector<1x2x256xf32> to vector<2x256xf32>
    %67 = vector.shape_cast %64 : vector<2x256xf32> to vector<1x2x256xf32>
    tpu.vector_store %arg10[%c1_26, %c0_27, %c0_28], %67 {strides = array<i32>} : memref<2x2x256xf32, #tpu.memory_space<vmem>>, vector<1x2x256xf32>,
    return
  }
}

</mosaic_0001>

<llo_original>
// kernel: squeeze.2
$region0: #{squeeze.2}
  %s0 = inlined_call_operand.vmem [shape: f32[1,2,256], index: 0, kind: input, shape index: {}]
  %s1 = inlined_call_operand.hbm [shape: f32[2,1,16,16], index: 1, kind: output, shape index: {}]
  $region1: #{squeeze.2} parent=0
    #allocation0 [shape = 'u8[16384]{0}', space=vmem, size = 0x4000, scoped, tag = 'operand span for operand 1']
    #allocation1 [shape = 's32[1]{0}', space=sflag, size = 0x4, scoped, tag = 'scoped memory for squeeze.2']
    #allocation2 [shape = 'u8[8192]{0}', space=vmem, size = 0x2000, scoped, tag = 'scoped mem for input reshape']
    %2 = vsyncpa [#allocation1], 0
    %s4 = ssub.s32 4, 1
    %s5 = scalar_lea.vmem %s0, 2
    %v6 = vld [vmem:[%s5] sm:%s4]
    %s7 = scalar_lea.vmem [#allocation2], 8
    %8 = vst [vmem:[%s7] sm:%s4] %v6
    %v9 = vld [vmem:[%s0] sm:%s4]
    %10 = vst [vmem:[#allocation2] sm:%s4] %v9
    %v11 = vld [vmem:[#allocation2] sm:$0x3]
    %vm12 = vcmask 130048
    %13 = vst.msk [vmem:[#allocation0] ss:$16 sm:$0x3] %vm12, %v11
    %s14 = scalar_lea.vmem [#allocation2], 8
    %v15 = vld [vmem:[%s14] sm:$0x3]
    %vm16 = vcmask 130048
    %s17 = scalar_lea.vmem [#allocation0], 8
    %18 = vst.msk [vmem:[%s17] ss:$16 sm:$0x3] %vm16, %v15
    %v19 = vld.sshfl [vmem:[#allocation2] sm:$0xff pattern:$0x99999180]
    %20 = vrot.lane.b32.xlu0 %v19, 112
    %v21 = vpop.permute.xlu0 %20
    %vm22 = vcmask 130048
    %s23 = scalar_lea.vmem [#allocation0], 1
    %24 = vst.msk [vmem:[%s23] ss:$8 sm:$0xf] %vm22, %v21
    %v25 = vld.sshfl [vmem:[#allocation2] sm:$0xff pattern:$0x99999180]
    %26 = vrot.lane.b32.xlu0 %v25, 96
    %v27 = vpop.permute.xlu0 %26
    %vm28 = vcmask 130048
    %s29 = scalar_lea.vmem [#allocation0], 2
    %30 = vst.msk [vmem:[%s29] ss:$8 sm:$0xf] %vm28, %v27
    %v31 = vld.sshfl [vmem:[#allocation2] sm:$0xff pattern:$0x99999180]
    %32 = vrot.lane.b32.xlu0 %v31, 80
    %v33 = vpop.permute.xlu0 %32
    %vm34 = vcmask 130048
    %s35 = scalar_lea.vmem [#allocation0], 3
    %36 = vst.msk [vmem:[%s35] ss:$8 sm:$0xf] %vm34, %v33
    %v37 = vld.sshfl [vmem:[#allocation2] sm:$0xff pattern:$0x99999180]
    %38 = vrot.lane.b32.xlu0 %v37, 64
    %v39 = vpop.permute.xlu0 %38
    %vm40 = vcmask 130048
    %s41 = scalar_lea.vmem [#allocation0], 4
    %42 = vst.msk [vmem:[%s41] ss:$8 sm:$0xf] %vm40, %v39
    %v43 = vld.sshfl [vmem:[#allocation2] sm:$0xff pattern:$0x99999180]
    %44 = vrot.lane.b32.xlu0 %v43, 48
    %v45 = vpop.permute.xlu0 %44
    %vm46 = vcmask 130048
    %s47 = scalar_lea.vmem [#allocation0], 5
    %48 = vst.msk [vmem:[%s47] ss:$8 sm:$0xf] %vm46, %v45
    %v49 = vld.sshfl [vmem:[#allocation2] sm:$0xff pattern:$0x99999180]
    %50 = vrot.lane.b32.xlu0 %v49, 32
    %v51 = vpop.permute.xlu0 %50
    %vm52 = vcmask 130048
    %s53 = scalar_lea.vmem [#allocation0], 6
    %54 = vst.msk [vmem:[%s53] ss:$8 sm:$0xf] %vm52, %v51
    %v55 = vld.sshfl [vmem:[#allocation2] sm:$0xff pattern:$0x99999180]
    %56 = vrot.lane.b32.xlu0 %v55, 16
    %v57 = vpop.permute.xlu0 %56
    %vm58 = vcmask 130048
    %s59 = scalar_lea.vmem [#allocation0], 7
    %60 = vst.msk [vmem:[%s59] ss:$8 sm:$0xf] %vm58, %v57
    %62 = vsyncadd [#allocation1], 0
    %s64 = sshll.u32 [#allocation0], 4
    %s65 = int_to_ptr.vmem [resolvable:$true] %s64
    %s66 = sshll.u32 %s1, 4
    %s67 = int_to_ptr.hbm [resolvable:$true] %s66
    %69 = dma.vmem_to_hbm [thread:$0]  %s65, 512, %s67, [#allocation1]
    %71 = dma.done [#allocation1], 512
    %72 = vsyncpa [#allocation1], 1

// kernel: mono_depth_stn_forward.1
$region0: #{mono_depth_stn_forward.1}
  #allocation0 [shape = 'u32[]', space=smem, size = 0x4, offset = 0x4, fixed_abs, tag = 'smem constant byte address 0x4 - core index']
  #allocation1 [shape = 'u32[72,128]{1,0:T(1,128)}', space=vmem, size = 0x9000, scoped, tag = 'internal scratch']
  %s0 = inlined_call_operand.vmem [shape: f32[2,768], index: 0, kind: input, shape index: {}]
  %s1 = inlined_call_operand.vmem [shape: f32[2,768], index: 1, kind: input, shape index: {}]
  %s2 = inlined_call_operand.vmem [shape: f32[2,768], index: 2, kind: input, shape index: {}]
  %s3 = inlined_call_operand.vmem [shape: bf16[768,6], index: 3, kind: input, shape index: {}]
  %s4 = inlined_call_operand.vmem [shape: bf16[768,6], index: 4, kind: input, shape index: {}]
  %s5 = inlined_call_operand.vmem [shape: f32[1,6], index: 5, kind: input, shape index: {}]
  %s6 = inlined_call_operand.vmem [shape: f32[6], index: 6, kind: input, shape index: {}]
  %s7 = inlined_call_operand.vmem [shape: f32[2], index: 7, kind: input, shape index: {}]
  %s8 = inlined_call_operand.hbm [shape: f32[2,6], index: 8, kind: output, shape index: {0}]
  %s9 = inlined_call_operand.hbm [shape: f32[2,6], index: 9, kind: output, shape index: {1}]
  %s10 = inlined_call_operand.vmem [shape: f32[2,2,256], index: 10, kind: output, shape index: {2}]
  %11 = xla_tuple %s8, %s9, %s10
  %s12 = sld [smem:[#allocation0]]
  $region66: #{mono_depth_stn_forward.1} parent=0
    _
  %s14 = ssub.s32 1, %s12
  %s15 = scalar_select 0, %s14, %s12
  $region1: #{mono_depth_stn_forward.1} parent=0
    #allocation2 [shape = 'u8[512]{0}', space=smem, size = 0x200, scoped, tag = 'input window, operand 6, single buffered']
    #allocation3 [shape = 's32[1]{0}', space=sflag, size = 0x4, scoped, tag = 'scoped memory for mono_depth_stn_forward.1']
    #allocation4 [shape = 's32[1]{0}', space=sflag, size = 0x4, scoped, tag = 'scoped memory for mono_depth_stn_forward.1']
    #allocation5 [shape = 'u8[512]{0}', space=smem, size = 0x200, scoped, tag = 'input window, operand 7, single buffered']
    #allocation6 [shape = 's32[1]{0}', space=sflag, size = 0x4, scoped, tag = 'scoped memory for mono_depth_stn_forward.1']
    #allocation7 [shape = 'u8[1024]{0}', space=vmem, size = 0x400, scoped, tag = 'output window, operand 0, single buffered']
    #allocation8 [shape = 'u8[1024]{0}', space=vmem, size = 0x400, scoped, tag = 'output window, operand 1, single buffered']
    #allocation9 [shape = 's32[1]{0}', space=sflag, size = 0x4, scoped, tag = 'scoped memory for mono_depth_stn_forward.1']
    %16 = vsyncpa [#allocation4], 0
    %17 = vsyncpa [#allocation6], 0
    %18 = vsyncpa [#allocation3], 0
    %19 = vsyncpa [#allocation9], 0
    // Predicated region
    $region2: #{mono_depth_stn_forward.1} parent=1 // pred_check
      _
    $region3: #{mono_depth_stn_forward.1} parent=1 // pred_check_branch
      %21 = sbr.rel (0) target = $region5
    $region4: #{mono_depth_stn_forward.1} parent=1 // pred_region
      _
    $region5: #{mono_depth_stn_forward.1} parent=1 // pred_fallthru
      _
    // Predicated region
    $region6: #{mono_depth_stn_forward.1} parent=1 // pred_check
      _
    $region7: #{mono_depth_stn_forward.1} parent=1 // pred_check_branch
      %23 = sbr.rel (0) target = $region9
    $region8: #{mono_depth_stn_forward.1} parent=1 // pred_region
      _
    $region9: #{mono_depth_stn_forward.1} parent=1 // pred_fallthru
      _
    // Predicated region
    $region10: #{mono_depth_stn_forward.1} parent=1 // pred_check
      _
    $region11: #{mono_depth_stn_forward.1} parent=1 // pred_check_branch
      %25 = sbr.rel (0) target = $region13
    $region12: #{mono_depth_stn_forward.1} parent=1 // pred_region
      _
    $region13: #{mono_depth_stn_forward.1} parent=1 // pred_fallthru
      _
    // Predicated region
    $region14: #{mono_depth_stn_forward.1} parent=1 // pred_check
      _
    $region15: #{mono_depth_stn_forward.1} parent=1 // pred_check_branch
      %27 = sbr.rel (0) target = $region17
    $region16: #{mono_depth_stn_forward.1} parent=1 // pred_region
      _
    $region17: #{mono_depth_stn_forward.1} parent=1 // pred_fallthru
      _
    // Predicated region
    $region18: #{mono_depth_stn_forward.1} parent=1 // pred_check
      _
    $region19: #{mono_depth_stn_forward.1} parent=1 // pred_check_branch
      %29 = sbr.rel (0) target = $region21
    $region20: #{mono_depth_stn_forward.1} parent=1 // pred_region
      _
    $region21: #{mono_depth_stn_forward.1} parent=1 // pred_fallthru
      _
    // Predicated region
    $region22: #{mono_depth_stn_forward.1} parent=1 // pred_check
      _
    $region23: #{mono_depth_stn_forward.1} parent=1 // pred_check_branch
      %31 = sbr.rel (0) target = $region25
    $region24: #{mono_depth_stn_forward.1} parent=1 // pred_region
      _
    $region25: #{mono_depth_stn_forward.1} parent=1 // pred_fallthru
      _
    // Predicated region
    $region26: #{mono_depth_stn_forward.1} parent=1 // pred_check
      _
    $region27: #{mono_depth_stn_forward.1} parent=1 // pred_check_branch
      %33 = sbr.rel (0) target = $region29
    $region28: #{mono_depth_stn_forward.1} parent=1 // pred_region
      %35 = vsyncadd [#allocation4], 0
      %s37 = sshll.u32 %s6, 4
      %s38 = int_to_ptr.vmem [resolvable:$true] %s37
      %40 = dma.vmem_to_smem %s38, 16, [#allocation2], [#allocation4]
    $region29: #{mono_depth_stn_forward.1} parent=1 // pred_fallthru
      _
    // Predicated region
    $region30: #{mono_depth_stn_forward.1} parent=1 // pred_check
      _
    $region31: #{mono_depth_stn_forward.1} parent=1 // pred_check_branch
      %42 = sbr.rel (0) target = $region33
    $region32: #{mono_depth_stn_forward.1} parent=1 // pred_region
      %44 = vsyncadd [#allocation6], 0
      %s46 = sshll.u32 %s7, 4
      %s47 = int_to_ptr.vmem [resolvable:$true] %s46
      %49 = dma.vmem_to_smem %s47, 16, [#allocation5], [#allocation6]
    $region33: #{mono_depth_stn_forward.1} parent=1 // pred_fallthru
      _
    // Predicated region
    $region34: #{mono_depth_stn_forward.1} parent=1 // pred_check
      _
    $region35: #{mono_depth_stn_forward.1} parent=1 // pred_check_branch
      %51 = sbr.rel (0) target = $region37
    $region36: #{mono_depth_stn_forward.1} parent=1 // pred_region
      %53 = dma.done [#allocation4], 16
    $region37: #{mono_depth_stn_forward.1} parent=1 // pred_fallthru
      _
    // Predicated region
    $region38: #{mono_depth_stn_forward.1} parent=1 // pred_check
      _
    $region39: #{mono_depth_stn_forward.1} parent=1 // pred_check_branch
      %55 = sbr.rel (0) target = $region41
    $region40: #{mono_depth_stn_forward.1} parent=1 // pred_region
      %57 = dma.done [#allocation6], 16
    $region41: #{mono_depth_stn_forward.1} parent=1 // pred_fallthru
      _
    %58 = sfence
    %v59 = vld [vmem:[%s3] sm:$0xf]
    %v60 = vld [vmem:[%s3 + $0x4] sm:$0xf]
    %v61 = vld [vmem:[%s3 + $0x8] sm:$0xf]
    %v62 = vld [vmem:[%s3 + $0xc] sm:$0xf]
    %v63 = vld [vmem:[%s3 + $0x10] sm:$0xf]
    %v64 = vld [vmem:[%s3 + $0x14] sm:$0xf]
    %v65 = vld [vmem:[%s3 + $0x18] sm:$0xf]
    %v66 = vld [vmem:[%s3 + $0x1c] sm:$0xf]
    %v67 = vld [vmem:[%s3 + $0x20] sm:$0xf]
    %v68 = vld [vmem:[%s3 + $0x24] sm:$0xf]
    %v69 = vld [vmem:[%s3 + $0x28] sm:$0xf]
    %v70 = vld [vmem:[%s3 + $0x2c] sm:$0xf]
    %v71 = vld [vmem:[%s3 + $0x30] sm:$0xf]
    %v72 = vld [vmem:[%s3 + $0x34] sm:$0xf]
    %v73 = vld [vmem:[%s3 + $0x38] sm:$0xf]
    %v74 = vld [vmem:[%s3 + $0x3c] sm:$0xf]
    %v75 = vld [vmem:[%s3 + $0x40] sm:$0xf]
    %v76 = vld [vmem:[%s3 + $0x44] sm:$0xf]
    %v77 = vld [vmem:[%s3 + $0x48] sm:$0xf]
    %v78 = vld [vmem:[%s3 + $0x4c] sm:$0xf]
    %v79 = vld [vmem:[%s3 + $0x50] sm:$0xf]
    %v80 = vld [vmem:[%s3 + $0x54] sm:$0xf]
    %v81 = vld [vmem:[%s3 + $0x58] sm:$0xf]
    %v82 = vld [vmem:[%s3 + $0x5c] sm:$0xf]
    %v83 = vld [vmem:[%s3 + $0x60] sm:$0xf]
    %v84 = vld [vmem:[%s3 + $0x64] sm:$0xf]
    %v85 = vld [vmem:[%s3 + $0x68] sm:$0xf]
    %v86 = vld [vmem:[%s3 + $0x6c] sm:$0xf]
    %v87 = vld [vmem:[%s3 + $0x70] sm:$0xf]
    %v88 = vld [vmem:[%s3 + $0x74] sm:$0xf]
    %v89 = vld [vmem:[%s3 + $0x78] sm:$0xf]
    %v90 = vld [vmem:[%s3 + $0x7c] sm:$0xf]
    %v91 = vld [vmem:[%s3 + $0x80] sm:$0xf]
    %v92 = vld [vmem:[%s3 + $0x84] sm:$0xf]
    %v93 = vld [vmem:[%s3 + $0x88] sm:$0xf]
    %v94 = vld [vmem:[%s3 + $0x8c] sm:$0xf]
    %v95 = vld [vmem:[%s3 + $0x90] sm:$0xf]
    %v96 = vld [vmem:[%s3 + $0x94] sm:$0xf]
    %v97 = vld [vmem:[%s3 + $0x98] sm:$0xf]
    %v98 = vld [vmem:[%s3 + $0x9c] sm:$0xf]
    %v99 = vld [vmem:[%s3 + $0xa0] sm:$0xf]
    %v100 = vld [vmem:[%s3 + $0xa4] sm:$0xf]
    %v101 = vld [vmem:[%s3 + $0xa8] sm:$0xf]
    %v102 = vld [vmem:[%s3 + $0xac] sm:$0xf]
    %v103 = vld [vmem:[%s3 + $0xb0] sm:$0xf]
    %v104 = vld [vmem:[%s3 + $0xb4] sm:$0xf]
    %v105 = vld [vmem:[%s3 + $0xb8] sm:$0xf]
    %v106 = vld [vmem:[%s3 + $0xbc] sm:$0xf]
    %v107 = vld [vmem:[%s3 + $0xc0] sm:$0xf]
    %v108 = vld [vmem:[%s3 + $0xc4] sm:$0xf]
    %v109 = vld [vmem:[%s3 + $0xc8] sm:$0xf]
    %v110 = vld [vmem:[%s3 + $0xcc] sm:$0xf]
    %v111 = vld [vmem:[%s3 + $0xd0] sm:$0xf]
    %v112 = vld [vmem:[%s3 + $0xd4] sm:$0xf]
    %v113 = vld [vmem:[%s3 + $0xd8] sm:$0xf]
    %v114 = vld [vmem:[%s3 + $0xdc] sm:$0xf]
    %v115 = vld [vmem:[%s3 + $0xe0] sm:$0xf]
    %v116 = vld [vmem:[%s3 + $0xe4] sm:$0xf]
    %v117 = vld [vmem:[%s3 + $0xe8] sm:$0xf]
    %v118 = vld [vmem:[%s3 + $0xec] sm:$0xf]
    %v119 = vld [vmem:[%s3 + $0xf0] sm:$0xf]
    %v120 = vld [vmem:[%s3 + $0xf4] sm:$0xf]
    %v121 = vld [vmem:[%s3 + $0xf8] sm:$0xf]
    %v122 = vld [vmem:[%s3 + $0xfc] sm:$0xf]
    %v123 = vld [vmem:[%s3 + $0x100] sm:$0xf]
    %v124 = vld [vmem:[%s3 + $0x104] sm:$0xf]
    %v125 = vld [vmem:[%s3 + $0x108] sm:$0xf]
    %v126 = vld [vmem:[%s3 + $0x10c] sm:$0xf]
    %v127 = vld [vmem:[%s3 + $0x110] sm:$0xf]
    %v128 = vld [vmem:[%s3 + $0x114] sm:$0xf]
    %v129 = vld [vmem:[%s3 + $0x118] sm:$0xf]
    %v130 = vld [vmem:[%s3 + $0x11c] sm:$0xf]
    %v131 = vld [vmem:[%s3 + $0x120] sm:$0xf]
    %v132 = vld [vmem:[%s3 + $0x124] sm:$0xf]
    %v133 = vld [vmem:[%s3 + $0x128] sm:$0xf]
    %v134 = vld [vmem:[%s3 + $0x12c] sm:$0xf]
    %v135 = vld [vmem:[%s3 + $0x130] sm:$0xf]
    %v136 = vld [vmem:[%s3 + $0x134] sm:$0xf]
    %v137 = vld [vmem:[%s3 + $0x138] sm:$0xf]
    %v138 = vld [vmem:[%s3 + $0x13c] sm:$0xf]
    %v139 = vld [vmem:[%s3 + $0x140] sm:$0xf]
    %v140 = vld [vmem:[%s3 + $0x144] sm:$0xf]
    %v141 = vld [vmem:[%s3 + $0x148] sm:$0xf]
    %v142 = vld [vmem:[%s3 + $0x14c] sm:$0xf]
    %v143 = vld [vmem:[%s3 + $0x150] sm:$0xf]
    %v144 = vld [vmem:[%s3 + $0x154] sm:$0xf]
    %v145 = vld [vmem:[%s3 + $0x158] sm:$0xf]
    %v146 = vld [vmem:[%s3 + $0x15c] sm:$0xf]
    %v147 = vld [vmem:[%s3 + $0x160] sm:$0xf]
    %v148 = vld [vmem:[%s3 + $0x164] sm:$0xf]
    %v149 = vld [vmem:[%s3 + $0x168] sm:$0xf]
    %v150 = vld [vmem:[%s3 + $0x16c] sm:$0xf]
    %v151 = vld [vmem:[%s3 + $0x170] sm:$0xf]
    %v152 = vld [vmem:[%s3 + $0x174] sm:$0xf]
    %v153 = vld [vmem:[%s3 + $0x178] sm:$0xf]
    %v154 = vld [vmem:[%s3 + $0x17c] sm:$0xf]
    %v155 = vld [vmem:[%s4] sm:$0xf]
    %v156 = vld [vmem:[%s4 + $0x4] sm:$0xf]
    %v157 = vld [vmem:[%s4 + $0x8] sm:$0xf]
    %v158 = vld [vmem:[%s4 + $0xc] sm:$0xf]
    %v159 = vld [vmem:[%s4 + $0x10] sm:$0xf]
    %v160 = vld [vmem:[%s4 + $0x14] sm:$0xf]
    %v161 = vld [vmem:[%s4 + $0x18] sm:$0xf]
    %v162 = vld [vmem:[%s4 + $0x1c] sm:$0xf]
    %v163 = vld [vmem:[%s4 + $0x20] sm:$0xf]
    %v164 = vld [vmem:[%s4 + $0x24] sm:$0xf]
    %v165 = vld [vmem:[%s4 + $0x28] sm:$0xf]
    %v166 = vld [vmem:[%s4 + $0x2c] sm:$0xf]
    %v167 = vld [vmem:[%s4 + $0x30] sm:$0xf]
    %v168 = vld [vmem:[%s4 + $0x34] sm:$0xf]
    %v169 = vld [vmem:[%s4 + $0x38] sm:$0xf]
    %v170 = vld [vmem:[%s4 + $0x3c] sm:$0xf]
    %v171 = vld [vmem:[%s4 + $0x40] sm:$0xf]
    %v172 = vld [vmem:[%s4 + $0x44] sm:$0xf]
    %v173 = vld [vmem:[%s4 + $0x48] sm:$0xf]
    %v174 = vld [vmem:[%s4 + $0x4c] sm:$0xf]
    %v175 = vld [vmem:[%s4 + $0x50] sm:$0xf]
    %v176 = vld [vmem:[%s4 + $0x54] sm:$0xf]
    %v177 = vld [vmem:[%s4 + $0x58] sm:$0xf]
    %v178 = vld [vmem:[%s4 + $0x5c] sm:$0xf]
    %v179 = vld [vmem:[%s4 + $0x60] sm:$0xf]
    %v180 = vld [vmem:[%s4 + $0x64] sm:$0xf]
    %v181 = vld [vmem:[%s4 + $0x68] sm:$0xf]
    %v182 = vld [vmem:[%s4 + $0x6c] sm:$0xf]
    %v183 = vld [vmem:[%s4 + $0x70] sm:$0xf]
    %v184 = vld [vmem:[%s4 + $0x74] sm:$0xf]
    %v185 = vld [vmem:[%s4 + $0x78] sm:$0xf]
    %v186 = vld [vmem:[%s4 + $0x7c] sm:$0xf]
    %v187 = vld [vmem:[%s4 + $0x80] sm:$0xf]
    %v188 = vld [vmem:[%s4 + $0x84] sm:$0xf]
    %v189 = vld [vmem:[%s4 + $0x88] sm:$0xf]
    %v190 = vld [vmem:[%s4 + $0x8c] sm:$0xf]
    %v191 = vld [vmem:[%s4 + $0x90] sm:$0xf]
    %v192 = vld [vmem:[%s4 + $0x94] sm:$0xf]
    %v193 = vld [vmem:[%s4 + $0x98] sm:$0xf]
    %v194 = vld [vmem:[%s4 + $0x9c] sm:$0xf]
    %v195 = vld [vmem:[%s4 + $0xa0] sm:$0xf]
    %v196 = vld [vmem:[%s4 + $0xa4] sm:$0xf]
    %v197 = vld [vmem:[%s4 + $0xa8] sm:$0xf]
    %v198 = vld [vmem:[%s4 + $0xac] sm:$0xf]
    %v199 = vld [vmem:[%s4 + $0xb0] sm:$0xf]
    %v200 = vld [vmem:[%s4 + $0xb4] sm:$0xf]
    %v201 = vld [vmem:[%s4 + $0xb8] sm:$0xf]
    %v202 = vld [vmem:[%s4 + $0xbc] sm:$0xf]
    %v203 = vld [vmem:[%s4 + $0xc0] sm:$0xf]
    %v204 = vld [vmem:[%s4 + $0xc4] sm:$0xf]
    %v205 = vld [vmem:[%s4 + $0xc8] sm:$0xf]
    %v206 = vld [vmem:[%s4 + $0xcc] sm:$0xf]
    %v207 = vld [vmem:[%s4 + $0xd0] sm:$0xf]
    %v208 = vld [vmem:[%s4 + $0xd4] sm:$0xf]
    %v209 = vld [vmem:[%s4 + $0xd8] sm:$0xf]
    %v210 = vld [vmem:[%s4 + $0xdc] sm:$0xf]
    %v211 = vld [vmem:[%s4 + $0xe0] sm:$0xf]
    %v212 = vld [vmem:[%s4 + $0xe4] sm:$0xf]
    %v213 = vld [vmem:[%s4 + $0xe8] sm:$0xf]
    %v214 = vld [vmem:[%s4 + $0xec] sm:$0xf]
    %v215 = vld [vmem:[%s4 + $0xf0] sm:$0xf]
    %v216 = vld [vmem:[%s4 + $0xf4] sm:$0xf]
    %v217 = vld [vmem:[%s4 + $0xf8] sm:$0xf]
    %v218 = vld [vmem:[%s4 + $0xfc] sm:$0xf]
    %v219 = vld [vmem:[%s4 + $0x100] sm:$0xf]
    %v220 = vld [vmem:[%s4 + $0x104] sm:$0xf]
    %v221 = vld [vmem:[%s4 + $0x108] sm:$0xf]
    %v222 = vld [vmem:[%s4 + $0x10c] sm:$0xf]
    %v223 = vld [vmem:[%s4 + $0x110] sm:$0xf]
    %v224 = vld [vmem:[%s4 + $0x114] sm:$0xf]
    %v225 = vld [vmem:[%s4 + $0x118] sm:$0xf]
    %v226 = vld [vmem:[%s4 + $0x11c] sm:$0xf]
    %v227 = vld [vmem:[%s4 + $0x120] sm:$0xf]
    %v228 = vld [vmem:[%s4 + $0x124] sm:$0xf]
    %v229 = vld [vmem:[%s4 + $0x128] sm:$0xf]
    %v230 = vld [vmem:[%s4 + $0x12c] sm:$0xf]
    %v231 = vld [vmem:[%s4 + $0x130] sm:$0xf]
    %v232 = vld [vmem:[%s4 + $0x134] sm:$0xf]
    %v233 = vld [vmem:[%s4 + $0x138] sm:$0xf]
    %v234 = vld [vmem:[%s4 + $0x13c] sm:$0xf]
    %v235 = vld [vmem:[%s4 + $0x140] sm:$0xf]
    %v236 = vld [vmem:[%s4 + $0x144] sm:$0xf]
    %v237 = vld [vmem:[%s4 + $0x148] sm:$0xf]
    %v238 = vld [vmem:[%s4 + $0x14c] sm:$0xf]
    %v239 = vld [vmem:[%s4 + $0x150] sm:$0xf]
    %v240 = vld [vmem:[%s4 + $0x154] sm:$0xf]
    %v241 = vld [vmem:[%s4 + $0x158] sm:$0xf]
    %v242 = vld [vmem:[%s4 + $0x15c] sm:$0xf]
    %v243 = vld [vmem:[%s4 + $0x160] sm:$0xf]
    %v244 = vld [vmem:[%s4 + $0x164] sm:$0xf]
    %v245 = vld [vmem:[%s4 + $0x168] sm:$0xf]
    %v246 = vld [vmem:[%s4 + $0x16c] sm:$0xf]
    %v247 = vld [vmem:[%s4 + $0x170] sm:$0xf]
    %v248 = vld [vmem:[%s4 + $0x174] sm:$0xf]
    %v249 = vld [vmem:[%s4 + $0x178] sm:$0xf]
    %v250 = vld [vmem:[%s4 + $0x17c] sm:$0xf]
    %v251 = vld [vmem:[%s5] sm:$0x1]
    %v252 = vld [vmem:[%s1] sm:$0xff]
    %v253 = vld [vmem:[%s1 + $0x8] sm:$0xf]
    %v254 = vld [vmem:[%s0] sm:$0xff]
    %v255 = vld [vmem:[%s0 + $0x8] sm:$0xf]
    %258 = vst [vmem:[#allocation1] ss:$4 sm:$0xff] %v254
    %s259 = scalar_lea.vmem [#allocation1], 32
    %260 = vst [vmem:[%s259] ss:$4 sm:$0xff] %v255
    %v261 = vld.sshfl [vmem:[#allocation1] sm:$0xff pattern:$0x73625140]
    %v262 = vld.sshfl [vmem:[#allocation1 + $0x8] sm:$0xff pattern:$0x73625140]
    %v263 = vld.sshfl [vmem:[#allocation1 + $0x10] sm:$0xff pattern:$0x73625140]
    %v264 = vld.sshfl [vmem:[#allocation1 + $0x18] sm:$0xff pattern:$0x73625140]
    %v265 = vld.sshfl [vmem:[#allocation1 + $0x20] sm:$0xff pattern:$0x73625140]
    %v266 = vld.sshfl [vmem:[#allocation1 + $0x28] sm:$0xff pattern:$0x73625140]
    %v273 = vpack.c.bf16 %v261, %v261
    %v274 = vpack.c.bf16 %v262, %v262
    %v275 = vpack.c.bf16 %v263, %v263
    %v276 = vpack.c.bf16 %v264, %v264
    %v277 = vpack.c.bf16 %v265, %v265
    %v278 = vpack.c.bf16 %v266, %v266
    %281 = vst [vmem:[#allocation1] ss:$4 sm:$0xff] %v252
    %s282 = scalar_lea.vmem [#allocation1], 32
    %283 = vst [vmem:[%s282] ss:$4 sm:$0xff] %v253
    %v284 = vld.sshfl [vmem:[#allocation1] sm:$0xff pattern:$0x73625140]
    %v285 = vld.sshfl [vmem:[#allocation1 + $0x8] sm:$0xff pattern:$0x73625140]
    %v286 = vld.sshfl [vmem:[#allocation1 + $0x10] sm:$0xff pattern:$0x73625140]
    %v287 = vld.sshfl [vmem:[#allocation1 + $0x18] sm:$0xff pattern:$0x73625140]
    %v288 = vld.sshfl [vmem:[#allocation1 + $0x20] sm:$0xff pattern:$0x73625140]
    %v289 = vld.sshfl [vmem:[#allocation1 + $0x28] sm:$0xff pattern:$0x73625140]
    %v296 = vpack.c.bf16 %v284, %v284
    %v297 = vpack.c.bf16 %v285, %v285
    %v298 = vpack.c.bf16 %v286, %v286
    %v299 = vpack.c.bf16 %v287, %v287
    %v300 = vpack.c.bf16 %v288, %v288
    %v301 = vpack.c.bf16 %v289, %v289
    %v302 = vld [vmem:[%s2] sm:$0xff]
    %v303 = vld [vmem:[%s2 + $0x8] sm:$0xf]
    %306 = vst [vmem:[#allocation1] ss:$4 sm:$0xff] %v302
    %s307 = scalar_lea.vmem [#allocation1], 32
    %308 = vst [vmem:[%s307] ss:$4 sm:$0xff] %v303
    %v309 = vld.sshfl [vmem:[#allocation1] sm:$0xff pattern:$0x73625140]
    %v310 = vld.sshfl [vmem:[#allocation1 + $0x8] sm:$0xff pattern:$0x73625140]
    %v311 = vld.sshfl [vmem:[#allocation1 + $0x10] sm:$0xff pattern:$0x73625140]
    %v312 = vld.sshfl [vmem:[#allocation1 + $0x18] sm:$0xff pattern:$0x73625140]
    %v313 = vld.sshfl [vmem:[#allocation1 + $0x20] sm:$0xff pattern:$0x73625140]
    %v314 = vld.sshfl [vmem:[#allocation1 + $0x28] sm:$0xff pattern:$0x73625140]
    %v321 = vpack.c.bf16 %v309, %v309
    %v322 = vpack.c.bf16 %v310, %v310
    %v323 = vpack.c.bf16 %v311, %v311
    %v324 = vpack.c.bf16 %v312, %v312
    %v325 = vpack.c.bf16 %v313, %v313
    %v326 = vpack.c.bf16 %v314, %v314
    %v423 = vunpack.c.l.b16 %v155
    %v424 = vunpack.c.l.b16 %v156
    %v425 = vunpack.c.l.b16 %v157
    %v426 = vunpack.c.l.b16 %v158
    %v427 = vunpack.c.l.b16 %v159
    %v428 = vunpack.c.l.b16 %v160
    %v429 = vunpack.c.l.b16 %v161
    %v430 = vunpack.c.l.b16 %v162
    %v431 = vunpack.c.l.b16 %v163
    %v432 = vunpack.c.l.b16 %v164
    %v433 = vunpack.c.l.b16 %v165
    %v434 = vunpack.c.l.b16 %v166
    %v435 = vunpack.c.l.b16 %v167
    %v436 = vunpack.c.l.b16 %v168
    %v437 = vunpack.c.l.b16 %v169
    %v438 = vunpack.c.l.b16 %v170
    %v439 = vunpack.c.l.b16 %v171
    %v440 = vunpack.c.l.b16 %v172
    %v441 = vunpack.c.l.b16 %v173
    %v442 = vunpack.c.l.b16 %v174
    %v443 = vunpack.c.l.b16 %v175
    %v444 = vunpack.c.l.b16 %v176
    %v445 = vunpack.c.l.b16 %v177
    %v446 = vunpack.c.l.b16 %v178
    %v447 = vunpack.c.l.b16 %v179
    %v448 = vunpack.c.l.b16 %v180
    %v449 = vunpack.c.l.b16 %v181
    %v450 = vunpack.c.l.b16 %v182
    %v451 = vunpack.c.l.b16 %v183
    %v452 = vunpack.c.l.b16 %v184
    %v453 = vunpack.c.l.b16 %v185
    %v454 = vunpack.c.l.b16 %v186
    %v455 = vunpack.c.l.b16 %v187
    %v456 = vunpack.c.l.b16 %v188
    %v457 = vunpack.c.l.b16 %v189
    %v458 = vunpack.c.l.b16 %v190
    %v459 = vunpack.c.l.b16 %v191
    %v460 = vunpack.c.l.b16 %v192
    %v461 = vunpack.c.l.b16 %v193
    %v462 = vunpack.c.l.b16 %v194
    %v463 = vunpack.c.l.b16 %v195
    %v464 = vunpack.c.l.b16 %v196
    %v465 = vunpack.c.l.b16 %v197
    %v466 = vunpack.c.l.b16 %v198
    %v467 = vunpack.c.l.b16 %v199
    %v468 = vunpack.c.l.b16 %v200
    %v469 = vunpack.c.l.b16 %v201
    %v470 = vunpack.c.l.b16 %v202
    %v471 = vunpack.c.l.b16 %v203
    %v472 = vunpack.c.l.b16 %v204
    %v473 = vunpack.c.l.b16 %v205
    %v474 = vunpack.c.l.b16 %v206
    %v475 = vunpack.c.l.b16 %v207
    %v476 = vunpack.c.l.b16 %v208
    %v477 = vunpack.c.l.b16 %v209
    %v478 = vunpack.c.l.b16 %v210
    %v479 = vunpack.c.l.b16 %v211
    %v480 = vunpack.c.l.b16 %v212
    %v481 = vunpack.c.l.b16 %v213
    %v482 = vunpack.c.l.b16 %v214
    %v483 = vunpack.c.l.b16 %v215
    %v484 = vunpack.c.l.b16 %v216
    %v485 = vunpack.c.l.b16 %v217
    %v486 = vunpack.c.l.b16 %v218
    %v487 = vunpack.c.l.b16 %v219
    %v488 = vunpack.c.l.b16 %v220
    %v489 = vunpack.c.l.b16 %v221
    %v490 = vunpack.c.l.b16 %v222
    %v491 = vunpack.c.l.b16 %v223
    %v492 = vunpack.c.l.b16 %v224
    %v493 = vunpack.c.l.b16 %v225
    %v494 = vunpack.c.l.b16 %v226
    %v495 = vunpack.c.l.b16 %v227
    %v496 = vunpack.c.l.b16 %v228
    %v497 = vunpack.c.l.b16 %v229
    %v498 = vunpack.c.l.b16 %v230
    %v499 = vunpack.c.l.b16 %v231
    %v500 = vunpack.c.l.b16 %v232
    %v501 = vunpack.c.l.b16 %v233
    %v502 = vunpack.c.l.b16 %v234
    %v503 = vunpack.c.l.b16 %v235
    %v504 = vunpack.c.l.b16 %v236
    %v505 = vunpack.c.l.b16 %v237
    %v506 = vunpack.c.l.b16 %v238
    %v507 = vunpack.c.l.b16 %v239
    %v508 = vunpack.c.l.b16 %v240
    %v509 = vunpack.c.l.b16 %v241
    %v510 = vunpack.c.l.b16 %v242
    %v511 = vunpack.c.l.b16 %v243
    %v512 = vunpack.c.l.b16 %v244
    %v513 = vunpack.c.l.b16 %v245
    %v514 = vunpack.c.l.b16 %v246
    %v515 = vunpack.c.l.b16 %v247
    %v516 = vunpack.c.l.b16 %v248
    %v517 = vunpack.c.l.b16 %v249
    %v518 = vunpack.c.l.b16 %v250
    %v519 = vpack.c.b16 %v424, %v423
    %v520 = vpack.c.b16 %v426, %v425
    %v521 = vpack.c.b16 %v428, %v427
    %v522 = vpack.c.b16 %v430, %v429
    %v523 = vpack.c.b16 %v432, %v431
    %v524 = vpack.c.b16 %v434, %v433
    %v525 = vpack.c.b16 %v436, %v435
    %v526 = vpack.c.b16 %v438, %v437
    %v527 = vpack.c.b16 %v440, %v439
    %v528 = vpack.c.b16 %v442, %v441
    %v529 = vpack.c.b16 %v444, %v443
    %v530 = vpack.c.b16 %v446, %v445
    %v531 = vpack.c.b16 %v448, %v447
    %v532 = vpack.c.b16 %v450, %v449
    %v533 = vpack.c.b16 %v452, %v451
    %v534 = vpack.c.b16 %v454, %v453
    %v535 = vpack.c.b16 %v456, %v455
    %v536 = vpack.c.b16 %v458, %v457
    %v537 = vpack.c.b16 %v460, %v459
    %v538 = vpack.c.b16 %v462, %v461
    %v539 = vpack.c.b16 %v464, %v463
    %v540 = vpack.c.b16 %v466, %v465
    %v541 = vpack.c.b16 %v468, %v467
    %v542 = vpack.c.b16 %v470, %v469
    %v543 = vpack.c.b16 %v472, %v471
    %v544 = vpack.c.b16 %v474, %v473
    %v545 = vpack.c.b16 %v476, %v475
    %v546 = vpack.c.b16 %v478, %v477
    %v547 = vpack.c.b16 %v480, %v479
    %v548 = vpack.c.b16 %v482, %v481
    %v549 = vpack.c.b16 %v484, %v483
    %v550 = vpack.c.b16 %v486, %v485
    %v551 = vpack.c.b16 %v488, %v487
    %v552 = vpack.c.b16 %v490, %v489
    %v553 = vpack.c.b16 %v492, %v491
    %v554 = vpack.c.b16 %v494, %v493
    %v555 = vpack.c.b16 %v496, %v495
    %v556 = vpack.c.b16 %v498, %v497
    %v557 = vpack.c.b16 %v500, %v499
    %v558 = vpack.c.b16 %v502, %v501
    %v559 = vpack.c.b16 %v504, %v503
    %v560 = vpack.c.b16 %v506, %v505
    %v561 = vpack.c.b16 %v508, %v507
    %v562 = vpack.c.b16 %v510, %v509
    %v563 = vpack.c.b16 %v512, %v511
    %v564 = vpack.c.b16 %v514, %v513
    %v565 = vpack.c.b16 %v516, %v515
    %v566 = vpack.c.b16 %v518, %v517
    %615 = vmatpush.bf16.msra.mxu0 %v526
    %616 = vmatpush.bf16.msra.mxu0 %v525
    %617 = vmatpush.bf16.msra.mxu0 %v524
    %618 = vmatpush.bf16.msra.mxu0 %v523
    %619 = vmatpush.bf16.msra.mxu0 %v522
    %620 = vmatpush.bf16.msra.mxu0 %v521
    %621 = vmatpush.bf16.msra.mxu0 %v520
    %622 = vmatpush.bf16.msra.mxu0 %v519
    %623 = vmatmul.bf16.gmra.mxu0 %v296
    %v624 = vpop.f32.mrf.mxu0
    %v625 = vadd.f32 0.0, %v624
    %v626 = vpop.f32.mrf.mxu0
    %627 = vdwg.mxu0
    %628 = vmatpush.bf16.msra.mxu0 %v534
    %629 = vmatpush.bf16.msra.mxu0 %v533
    %630 = vmatpush.bf16.msra.mxu0 %v532
    %631 = vmatpush.bf16.msra.mxu0 %v531
    %632 = vmatpush.bf16.msra.mxu0 %v530
    %633 = vmatpush.bf16.msra.mxu0 %v529
    %634 = vmatpush.bf16.msra.mxu0 %v528
    %635 = vmatpush.bf16.msra.mxu0 %v527
    %636 = vmatmul.bf16.gmra.mxu0 %v297
    %v637 = vpop.f32.mrf.mxu0
    %v638 = vadd.f32 %v625, %v637
    %v639 = vpop.f32.mrf.mxu0
    %640 = vdwg.mxu0
    %641 = vmatpush.bf16.msra.mxu0 %v542
    %642 = vmatpush.bf16.msra.mxu0 %v541
    %643 = vmatpush.bf16.msra.mxu0 %v540
    %644 = vmatpush.bf16.msra.mxu0 %v539
    %645 = vmatpush.bf16.msra.mxu0 %v538
    %646 = vmatpush.bf16.msra.mxu0 %v537
    %647 = vmatpush.bf16.msra.mxu0 %v536
    %648 = vmatpush.bf16.msra.mxu0 %v535
    %649 = vmatmul.bf16.gmra.mxu0 %v298
    %v650 = vpop.f32.mrf.mxu0
    %v651 = vadd.f32 %v638, %v650
    %v652 = vpop.f32.mrf.mxu0
    %653 = vdwg.mxu0
    %654 = vmatpush.bf16.msra.mxu0 %v550
    %655 = vmatpush.bf16.msra.mxu0 %v549
    %656 = vmatpush.bf16.msra.mxu0 %v548
    %657 = vmatpush.bf16.msra.mxu0 %v547
    %658 = vmatpush.bf16.msra.mxu0 %v546
    %659 = vmatpush.bf16.msra.mxu0 %v545
    %660 = vmatpush.bf16.msra.mxu0 %v544
    %661 = vmatpush.bf16.msra.mxu0 %v543
    %662 = vmatmul.bf16.gmra.mxu0 %v299
    %v663 = vpop.f32.mrf.mxu0
    %v664 = vadd.f32 %v651, %v663
    %v665 = vpop.f32.mrf.mxu0
    %666 = vdwg.mxu0
    %667 = vmatpush.bf16.msra.mxu0 %v558
    %668 = vmatpush.bf16.msra.mxu0 %v557
    %669 = vmatpush.bf16.msra.mxu0 %v556
    %670 = vmatpush.bf16.msra.mxu0 %v555
    %671 = vmatpush.bf16.msra.mxu0 %v554
    %672 = vmatpush.bf16.msra.mxu0 %v553
    %673 = vmatpush.bf16.msra.mxu0 %v552
    %674 = vmatpush.bf16.msra.mxu0 %v551
    %675 = vmatmul.bf16.gmra.mxu0 %v300
    %v676 = vpop.f32.mrf.mxu0
    %v677 = vadd.f32 %v664, %v676
    %v678 = vpop.f32.mrf.mxu0
    %679 = vdwg.mxu0
    %680 = vmatpush.bf16.msra.mxu0 %v566
    %681 = vmatpush.bf16.msra.mxu0 %v565
    %682 = vmatpush.bf16.msra.mxu0 %v564
    %683 = vmatpush.bf16.msra.mxu0 %v563
    %684 = vmatpush.bf16.msra.mxu0 %v562
    %685 = vmatpush.bf16.msra.mxu0 %v561
    %686 = vmatpush.bf16.msra.mxu0 %v560
    %687 = vmatpush.bf16.msra.mxu0 %v559
    %688 = vmatmul.bf16.gmra.mxu0 %v301
    %v689 = vpop.f32.mrf.mxu0
    %v690 = vadd.f32 %v677, %v689
    %v691 = vpop.f32.mrf.mxu0
    %692 = vdwg.mxu0
    %v789 = vunpack.c.l.b16 %v59
    %v790 = vunpack.c.l.b16 %v60
    %v791 = vunpack.c.l.b16 %v61
    %v792 = vunpack.c.l.b16 %v62
    %v793 = vunpack.c.l.b16 %v63
    %v794 = vunpack.c.l.b16 %v64
    %v795 = vunpack.c.l.b16 %v65
    %v796 = vunpack.c.l.b16 %v66
    %v797 = vunpack.c.l.b16 %v67
    %v798 = vunpack.c.l.b16 %v68
    %v799 = vunpack.c.l.b16 %v69
    %v800 = vunpack.c.l.b16 %v70
    %v801 = vunpack.c.l.b16 %v71
    %v802 = vunpack.c.l.b16 %v72
    %v803 = vunpack.c.l.b16 %v73
    %v804 = vunpack.c.l.b16 %v74
    %v805 = vunpack.c.l.b16 %v75
    %v806 = vunpack.c.l.b16 %v76
    %v807 = vunpack.c.l.b16 %v77
    %v808 = vunpack.c.l.b16 %v78
    %v809 = vunpack.c.l.b16 %v79
    %v810 = vunpack.c.l.b16 %v80
    %v811 = vunpack.c.l.b16 %v81
    %v812 = vunpack.c.l.b16 %v82
    %v813 = vunpack.c.l.b16 %v83
    %v814 = vunpack.c.l.b16 %v84
    %v815 = vunpack.c.l.b16 %v85
    %v816 = vunpack.c.l.b16 %v86
    %v817 = vunpack.c.l.b16 %v87
    %v818 = vunpack.c.l.b16 %v88
    %v819 = vunpack.c.l.b16 %v89
    %v820 = vunpack.c.l.b16 %v90
    %v821 = vunpack.c.l.b16 %v91
    %v822 = vunpack.c.l.b16 %v92
    %v823 = vunpack.c.l.b16 %v93
    %v824 = vunpack.c.l.b16 %v94
    %v825 = vunpack.c.l.b16 %v95
    %v826 = vunpack.c.l.b16 %v96
    %v827 = vunpack.c.l.b16 %v97
    %v828 = vunpack.c.l.b16 %v98
    %v829 = vunpack.c.l.b16 %v99
    %v830 = vunpack.c.l.b16 %v100
    %v831 = vunpack.c.l.b16 %v101
    %v832 = vunpack.c.l.b16 %v102
    %v833 = vunpack.c.l.b16 %v103
    %v834 = vunpack.c.l.b16 %v104
    %v835 = vunpack.c.l.b16 %v105
    %v836 = vunpack.c.l.b16 %v106
    %v837 = vunpack.c.l.b16 %v107
    %v838 = vunpack.c.l.b16 %v108
    %v839 = vunpack.c.l.b16 %v109
    %v840 = vunpack.c.l.b16 %v110
    %v841 = vunpack.c.l.b16 %v111
    %v842 = vunpack.c.l.b16 %v112
    %v843 = vunpack.c.l.b16 %v113
    %v844 = vunpack.c.l.b16 %v114
    %v845 = vunpack.c.l.b16 %v115
    %v846 = vunpack.c.l.b16 %v116
    %v847 = vunpack.c.l.b16 %v117
    %v848 = vunpack.c.l.b16 %v118
    %v849 = vunpack.c.l.b16 %v119
    %v850 = vunpack.c.l.b16 %v120
    %v851 = vunpack.c.l.b16 %v121
    %v852 = vunpack.c.l.b16 %v122
    %v853 = vunpack.c.l.b16 %v123
    %v854 = vunpack.c.l.b16 %v124
    %v855 = vunpack.c.l.b16 %v125
    %v856 = vunpack.c.l.b16 %v126
    %v857 = vunpack.c.l.b16 %v127
    %v858 = vunpack.c.l.b16 %v128
    %v859 = vunpack.c.l.b16 %v129
    %v860 = vunpack.c.l.b16 %v130
    %v861 = vunpack.c.l.b16 %v131
    %v862 = vunpack.c.l.b16 %v132
    %v863 = vunpack.c.l.b16 %v133
    %v864 = vunpack.c.l.b16 %v134
    %v865 = vunpack.c.l.b16 %v135
    %v866 = vunpack.c.l.b16 %v136
    %v867 = vunpack.c.l.b16 %v137
    %v868 = vunpack.c.l.b16 %v138
    %v869 = vunpack.c.l.b16 %v139
    %v870 = vunpack.c.l.b16 %v140
    %v871 = vunpack.c.l.b16 %v141
    %v872 = vunpack.c.l.b16 %v142
    %v873 = vunpack.c.l.b16 %v143
    %v874 = vunpack.c.l.b16 %v144
    %v875 = vunpack.c.l.b16 %v145
    %v876 = vunpack.c.l.b16 %v146
    %v877 = vunpack.c.l.b16 %v147
    %v878 = vunpack.c.l.b16 %v148
    %v879 = vunpack.c.l.b16 %v149
    %v880 = vunpack.c.l.b16 %v150
    %v881 = vunpack.c.l.b16 %v151
    %v882 = vunpack.c.l.b16 %v152
    %v883 = vunpack.c.l.b16 %v153
    %v884 = vunpack.c.l.b16 %v154
    %v885 = vpack.c.b16 %v790, %v789
    %v886 = vpack.c.b16 %v792, %v791
    %v887 = vpack.c.b16 %v794, %v793
    %v888 = vpack.c.b16 %v796, %v795
    %v889 = vpack.c.b16 %v798, %v797
    %v890 = vpack.c.b16 %v800, %v799
    %v891 = vpack.c.b16 %v802, %v801
    %v892 = vpack.c.b16 %v804, %v803
    %v893 = vpack.c.b16 %v806, %v805
    %v894 = vpack.c.b16 %v808, %v807
    %v895 = vpack.c.b16 %v810, %v809
    %v896 = vpack.c.b16 %v812, %v811
    %v897 = vpack.c.b16 %v814, %v813
    %v898 = vpack.c.b16 %v816, %v815
    %v899 = vpack.c.b16 %v818, %v817
    %v900 = vpack.c.b16 %v820, %v819
    %v901 = vpack.c.b16 %v822, %v821
    %v902 = vpack.c.b16 %v824, %v823
    %v903 = vpack.c.b16 %v826, %v825
    %v904 = vpack.c.b16 %v828, %v827
    %v905 = vpack.c.b16 %v830, %v829
    %v906 = vpack.c.b16 %v832, %v831
    %v907 = vpack.c.b16 %v834, %v833
    %v908 = vpack.c.b16 %v836, %v835
    %v909 = vpack.c.b16 %v838, %v837
    %v910 = vpack.c.b16 %v840, %v839
    %v911 = vpack.c.b16 %v842, %v841
    %v912 = vpack.c.b16 %v844, %v843
    %v913 = vpack.c.b16 %v846, %v845
    %v914 = vpack.c.b16 %v848, %v847
    %v915 = vpack.c.b16 %v850, %v849
    %v916 = vpack.c.b16 %v852, %v851
    %v917 = vpack.c.b16 %v854, %v853
    %v918 = vpack.c.b16 %v856, %v855
    %v919 = vpack.c.b16 %v858, %v857
    %v920 = vpack.c.b16 %v860, %v859
    %v921 = vpack.c.b16 %v862, %v861
    %v922 = vpack.c.b16 %v864, %v863
    %v923 = vpack.c.b16 %v866, %v865
    %v924 = vpack.c.b16 %v868, %v867
    %v925 = vpack.c.b16 %v870, %v869
    %v926 = vpack.c.b16 %v872, %v871
    %v927 = vpack.c.b16 %v874, %v873
    %v928 = vpack.c.b16 %v876, %v875
    %v929 = vpack.c.b16 %v878, %v877
    %v930 = vpack.c.b16 %v880, %v879
    %v931 = vpack.c.b16 %v882, %v881
    %v932 = vpack.c.b16 %v884, %v883
    %981 = vmatpush.bf16.msra.mxu0 %v892
    %982 = vmatpush.bf16.msra.mxu0 %v891
    %983 = vmatpush.bf16.msra.mxu0 %v890
    %984 = vmatpush.bf16.msra.mxu0 %v889
    %985 = vmatpush.bf16.msra.mxu0 %v888
    %986 = vmatpush.bf16.msra.mxu0 %v887
    %987 = vmatpush.bf16.msra.mxu0 %v886
    %988 = vmatpush.bf16.msra.mxu0 %v885
    %989 = vmatmul.bf16.gmra.mxu0 %v273
    %v990 = vpop.f32.mrf.mxu0
    %v991 = vadd.f32 %v690, %v990
    %v992 = vpop.f32.mrf.mxu0
    %993 = vdwg.mxu0
    %994 = vmatpush.bf16.msra.mxu0 %v900
    %995 = vmatpush.bf16.msra.mxu0 %v899
    %996 = vmatpush.bf16.msra.mxu0 %v898
    %997 = vmatpush.bf16.msra.mxu0 %v897
    %998 = vmatpush.bf16.msra.mxu0 %v896
    %999 = vmatpush.bf16.msra.mxu0 %v895
    %1000 = vmatpush.bf16.msra.mxu0 %v894
    %1001 = vmatpush.bf16.msra.mxu0 %v893
    %1002 = vmatmul.bf16.gmra.mxu0 %v274
    %v1003 = vpop.f32.mrf.mxu0
    %v1004 = vadd.f32 %v991, %v1003
    %v1005 = vpop.f32.mrf.mxu0
    %1006 = vdwg.mxu0
    %1007 = vmatpush.bf16.msra.mxu0 %v908
    %1008 = vmatpush.bf16.msra.mxu0 %v907
    %1009 = vmatpush.bf16.msra.mxu0 %v906
    %1010 = vmatpush.bf16.msra.mxu0 %v905
    %1011 = vmatpush.bf16.msra.mxu0 %v904
    %1012 = vmatpush.bf16.msra.mxu0 %v903
    %1013 = vmatpush.bf16.msra.mxu0 %v902
    %1014 = vmatpush.bf16.msra.mxu0 %v901
    %1015 = vmatmul.bf16.gmra.mxu0 %v275
    %v1016 = vpop.f32.mrf.mxu0
    %v1017 = vadd.f32 %v1004, %v1016
    %v1018 = vpop.f32.mrf.mxu0
    %1019 = vdwg.mxu0
    %1020 = vmatpush.bf16.msra.mxu0 %v916
    %1021 = vmatpush.bf16.msra.mxu0 %v915
    %1022 = vmatpush.bf16.msra.mxu0 %v914
    %1023 = vmatpush.bf16.msra.mxu0 %v913
    %1024 = vmatpush.bf16.msra.mxu0 %v912
    %1025 = vmatpush.bf16.msra.mxu0 %v911
    %1026 = vmatpush.bf16.msra.mxu0 %v910
    %1027 = vmatpush.bf16.msra.mxu0 %v909
    %1028 = vmatmul.bf16.gmra.mxu0 %v276
    %v1029 = vpop.f32.mrf.mxu0
    %v1030 = vadd.f32 %v1017, %v1029
    %v1031 = vpop.f32.mrf.mxu0
    %1032 = vdwg.mxu0
    %1033 = vmatpush.bf16.msra.mxu0 %v924
    %1034 = vmatpush.bf16.msra.mxu0 %v923
    %1035 = vmatpush.bf16.msra.mxu0 %v922
    %1036 = vmatpush.bf16.msra.mxu0 %v921
    %1037 = vmatpush.bf16.msra.mxu0 %v920
    %1038 = vmatpush.bf16.msra.mxu0 %v919
    %1039 = vmatpush.bf16.msra.mxu0 %v918
    %1040 = vmatpush.bf16.msra.mxu0 %v917
    %1041 = vmatmul.bf16.gmra.mxu0 %v277
    %v1042 = vpop.f32.mrf.mxu0
    %v1043 = vadd.f32 %v1030, %v1042
    %v1044 = vpop.f32.mrf.mxu0
    %1045 = vdwg.mxu0
    %1046 = vmatpush.bf16.msra.mxu0 %v932
    %1047 = vmatpush.bf16.msra.mxu0 %v931
    %1048 = vmatpush.bf16.msra.mxu0 %v930
    %1049 = vmatpush.bf16.msra.mxu0 %v929
    %1050 = vmatpush.bf16.msra.mxu0 %v928
    %1051 = vmatpush.bf16.msra.mxu0 %v927
    %1052 = vmatpush.bf16.msra.mxu0 %v926
    %1053 = vmatpush.bf16.msra.mxu0 %v925
    %1054 = vmatmul.bf16.gmra.mxu0 %v278
    %v1055 = vpop.f32.mrf.mxu0
    %v1056 = vadd.f32 %v1043, %v1055
    %v1057 = vpop.f32.mrf.mxu0
    %1058 = vdwg.mxu0
    %v1060 = vperm.slane %v251, 0
    %v1062 = vadd.f32 %v1056, %v1060
    %vm1063 = vcmask 41984
    %1064 = vst.msk [vmem:[#allocation7] sm:$0x3] %vm1063, %v1062
    %1065 = vmatpush.bf16.msra.mxu0 %v526
    %1066 = vmatpush.bf16.msra.mxu0 %v525
    %1067 = vmatpush.bf16.msra.mxu0 %v524
    %1068 = vmatpush.bf16.msra.mxu0 %v523
    %1069 = vmatpush.bf16.msra.mxu0 %v522
    %1070 = vmatpush.bf16.msra.mxu0 %v521
    %1071 = vmatpush.bf16.msra.mxu0 %v520
    %1072 = vmatpush.bf16.msra.mxu0 %v519
    %1073 = vmatmul.bf16.gmra.mxu0 %v321
    %v1074 = vpop.f32.mrf.mxu0
    %v1075 = vadd.f32 0.0, %v1074
    %v1076 = vpop.f32.mrf.mxu0
    %1077 = vdwg.mxu0
    %1078 = vmatpush.bf16.msra.mxu0 %v534
    %1079 = vmatpush.bf16.msra.mxu0 %v533
    %1080 = vmatpush.bf16.msra.mxu0 %v532
    %1081 = vmatpush.bf16.msra.mxu0 %v531
    %1082 = vmatpush.bf16.msra.mxu0 %v530
    %1083 = vmatpush.bf16.msra.mxu0 %v529
    %1084 = vmatpush.bf16.msra.mxu0 %v528
    %1085 = vmatpush.bf16.msra.mxu0 %v527
    %1086 = vmatmul.bf16.gmra.mxu0 %v322
    %v1087 = vpop.f32.mrf.mxu0
    %v1088 = vadd.f32 %v1075, %v1087
    %v1089 = vpop.f32.mrf.mxu0
    %1090 = vdwg.mxu0
    %1091 = vmatpush.bf16.msra.mxu0 %v542
    %1092 = vmatpush.bf16.msra.mxu0 %v541
    %1093 = vmatpush.bf16.msra.mxu0 %v540
    %1094 = vmatpush.bf16.msra.mxu0 %v539
    %1095 = vmatpush.bf16.msra.mxu0 %v538
    %1096 = vmatpush.bf16.msra.mxu0 %v537
    %1097 = vmatpush.bf16.msra.mxu0 %v536
    %1098 = vmatpush.bf16.msra.mxu0 %v535
    %1099 = vmatmul.bf16.gmra.mxu0 %v323
    %v1100 = vpop.f32.mrf.mxu0
    %v1101 = vadd.f32 %v1088, %v1100
    %v1102 = vpop.f32.mrf.mxu0
    %1103 = vdwg.mxu0
    %1104 = vmatpush.bf16.msra.mxu0 %v550
    %1105 = vmatpush.bf16.msra.mxu0 %v549
    %1106 = vmatpush.bf16.msra.mxu0 %v548
    %1107 = vmatpush.bf16.msra.mxu0 %v547
    %1108 = vmatpush.bf16.msra.mxu0 %v546
    %1109 = vmatpush.bf16.msra.mxu0 %v545
    %1110 = vmatpush.bf16.msra.mxu0 %v544
    %1111 = vmatpush.bf16.msra.mxu0 %v543
    %1112 = vmatmul.bf16.gmra.mxu0 %v324
    %v1113 = vpop.f32.mrf.mxu0
    %v1114 = vadd.f32 %v1101, %v1113
    %v1115 = vpop.f32.mrf.mxu0
    %1116 = vdwg.mxu0
    %1117 = vmatpush.bf16.msra.mxu0 %v558
    %1118 = vmatpush.bf16.msra.mxu0 %v557
    %1119 = vmatpush.bf16.msra.mxu0 %v556
    %1120 = vmatpush.bf16.msra.mxu0 %v555
    %1121 = vmatpush.bf16.msra.mxu0 %v554
    %1122 = vmatpush.bf16.msra.mxu0 %v553
    %1123 = vmatpush.bf16.msra.mxu0 %v552
    %1124 = vmatpush.bf16.msra.mxu0 %v551
    %1125 = vmatmul.bf16.gmra.mxu0 %v325
    %v1126 = vpop.f32.mrf.mxu0
    %v1127 = vadd.f32 %v1114, %v1126
    %v1128 = vpop.f32.mrf.mxu0
    %1129 = vdwg.mxu0
    %1130 = vmatpush.bf16.msra.mxu0 %v566
    %1131 = vmatpush.bf16.msra.mxu0 %v565
    %1132 = vmatpush.bf16.msra.mxu0 %v564
    %1133 = vmatpush.bf16.msra.mxu0 %v563
    %1134 = vmatpush.bf16.msra.mxu0 %v562
    %1135 = vmatpush.bf16.msra.mxu0 %v561
    %1136 = vmatpush.bf16.msra.mxu0 %v560
    %1137 = vmatpush.bf16.msra.mxu0 %v559
    %1138 = vmatmul.bf16.gmra.mxu0 %v326
    %v1139 = vpop.f32.mrf.mxu0
    %v1140 = vadd.f32 %v1127, %v1139
    %v1141 = vpop.f32.mrf.mxu0
    %1142 = vdwg.mxu0
    %1143 = vmatpush.bf16.msra.mxu0 %v892
    %1144 = vmatpush.bf16.msra.mxu0 %v891
    %1145 = vmatpush.bf16.msra.mxu0 %v890
    %1146 = vmatpush.bf16.msra.mxu0 %v889
    %1147 = vmatpush.bf16.msra.mxu0 %v888
    %1148 = vmatpush.bf16.msra.mxu0 %v887
    %1149 = vmatpush.bf16.msra.mxu0 %v886
    %1150 = vmatpush.bf16.msra.mxu0 %v885
    %1151 = vmatmul.bf16.gmra.mxu0 %v296
    %v1152 = vpop.f32.mrf.mxu0
    %v1153 = vadd.f32 %v1140, %v1152
    %v1154 = vpop.f32.mrf.mxu0
    %1155 = vdwg.mxu0
    %1156 = vmatpush.bf16.msra.mxu0 %v900
    %1157 = vmatpush.bf16.msra.mxu0 %v899
    %1158 = vmatpush.bf16.msra.mxu0 %v898
    %1159 = vmatpush.bf16.msra.mxu0 %v897
    %1160 = vmatpush.bf16.msra.mxu0 %v896
    %1161 = vmatpush.bf16.msra.mxu0 %v895
    %1162 = vmatpush.bf16.msra.mxu0 %v894
    %1163 = vmatpush.bf16.msra.mxu0 %v893
    %1164 = vmatmul.bf16.gmra.mxu0 %v297
    %v1165 = vpop.f32.mrf.mxu0
    %v1166 = vadd.f32 %v1153, %v1165
    %v1167 = vpop.f32.mrf.mxu0
    %1168 = vdwg.mxu0
    %1169 = vmatpush.bf16.msra.mxu0 %v908
    %1170 = vmatpush.bf16.msra.mxu0 %v907
    %1171 = vmatpush.bf16.msra.mxu0 %v906
    %1172 = vmatpush.bf16.msra.mxu0 %v905
    %1173 = vmatpush.bf16.msra.mxu0 %v904
    %1174 = vmatpush.bf16.msra.mxu0 %v903
    %1175 = vmatpush.bf16.msra.mxu0 %v902
    %1176 = vmatpush.bf16.msra.mxu0 %v901
    %1177 = vmatmul.bf16.gmra.mxu0 %v298
    %v1178 = vpop.f32.mrf.mxu0
    %v1179 = vadd.f32 %v1166, %v1178
    %v1180 = vpop.f32.mrf.mxu0
    %1181 = vdwg.mxu0
    %1182 = vmatpush.bf16.msra.mxu0 %v916
    %1183 = vmatpush.bf16.msra.mxu0 %v915
    %1184 = vmatpush.bf16.msra.mxu0 %v914
    %1185 = vmatpush.bf16.msra.mxu0 %v913
    %1186 = vmatpush.bf16.msra.mxu0 %v912
    %1187 = vmatpush.bf16.msra.mxu0 %v911
    %1188 = vmatpush.bf16.msra.mxu0 %v910
    %1189 = vmatpush.bf16.msra.mxu0 %v909
    %1190 = vmatmul.bf16.gmra.mxu0 %v299
    %v1191 = vpop.f32.mrf.mxu0
    %v1192 = vadd.f32 %v1179, %v1191
    %v1193 = vpop.f32.mrf.mxu0
    %1194 = vdwg.mxu0
    %1195 = vmatpush.bf16.msra.mxu0 %v924
    %1196 = vmatpush.bf16.msra.mxu0 %v923
    %1197 = vmatpush.bf16.msra.mxu0 %v922
    %1198 = vmatpush.bf16.msra.mxu0 %v921
    %1199 = vmatpush.bf16.msra.mxu0 %v920
    %1200 = vmatpush.bf16.msra.mxu0 %v919
    %1201 = vmatpush.bf16.msra.mxu0 %v918
    %1202 = vmatpush.bf16.msra.mxu0 %v917
    %1203 = vmatmul.bf16.gmra.mxu0 %v300
    %v1204 = vpop.f32.mrf.mxu0
    %v1205 = vadd.f32 %v1192, %v1204
    %v1206 = vpop.f32.mrf.mxu0
    %1207 = vdwg.mxu0
    %1208 = vmatpush.bf16.msra.mxu0 %v932
    %1209 = vmatpush.bf16.msra.mxu0 %v931
    %1210 = vmatpush.bf16.msra.mxu0 %v930
    %1211 = vmatpush.bf16.msra.mxu0 %v929
    %1212 = vmatpush.bf16.msra.mxu0 %v928
    %1213 = vmatpush.bf16.msra.mxu0 %v927
    %1214 = vmatpush.bf16.msra.mxu0 %v926
    %1215 = vmatpush.bf16.msra.mxu0 %v925
    %1216 = vmatmul.bf16.gmra.mxu0 %v301
    %v1217 = vpop.f32.mrf.mxu0
    %v1218 = vadd.f32 %v1205, %v1217
    %v1219 = vpop.f32.mrf.mxu0
    %1220 = vdwg.mxu0
    %v1221 = vadd.f32 %v1218, %v1060
    %1222 = vst.msk [vmem:[#allocation8] sm:$0x3] %vm1063, %v1221
    %s1223 = sld [smem:[#allocation2]]
    %s1224 = sld [smem:[#allocation2 + $0x1]]
    %s1225 = sld [smem:[#allocation2 + $0x2]]
    %s1226 = sld [smem:[#allocation2 + $0x3]]
    %s1227 = sld [smem:[#allocation2 + $0x4]]
    %s1228 = sld [smem:[#allocation2 + $0x5]]
    %s1229 = sld [smem:[#allocation5]]
    %s1230 = sld [smem:[#allocation5 + $0x1]]
    %v1231 = vstv %s1226
    %v1232 = vmul.f32 %v1231, %v252
    %v1233 = vstv %s1230
    %v1234 = vadd.f32 %v1233, %v1232
    %v1235 = vstv %s1227
    %v1236 = vrot.slane %v252, 4
    %v1238 = vmul.f32 %v1235, %v1236
    %v1239 = vadd.f32 %v1234, %v1238
    %v1240 = vstv %s1228
    %v1241 = vmul.f32 %v1240, %v253
    %v1242 = vadd.f32 %v1239, %v1241
    %v1243 = vxor.u32 %v1242, 2147483648
    %v1244 = vmul.f32 %v1243, 1.442695
    %v1245 = vpow.pop %v1244
    %v1246 = vadd.f32 %v1245, 1.0
    %v1247 = vrcp.pop %v1246
    %v1248 = vmul.f32 %v1246, %v1247
    %v1249 = vsub.f32 1.0, %v1248
    %v1250 = vmul.f32 %v1247, %v1249
    %v1251 = vadd.f32 %v1247, %v1250
    %vm1252 = vweird.f32 %v1246
    %vm1253 = vweird.f32 %v1247
    %vm1254 = vmor %vm1252, %vm1253
    %v1255 = vsel %vm1254, %v1247, %v1251
    %v1256 = vand.u32 2147483647, %v1246
    %vm1257 = vcmp.eq.f32.partialorder %v1256, 8.507059e+37
    %v1258 = vand.u32 %v1246, 2147483648
    %v1259 = vor.u32 1.1754944e-38, %v1258
    %v1260 = vsel %vm1257, %v1259, %v1255
    %v1261 = vmul.f32 1.0, %v1260
    %1262 = vst [vmem:[%s10] sm:$0xf] %v1261
    %v1263 = vstv %s1223
    %v1264 = vmul.f32 %v1263, %v252
    %v1265 = vstv %s1229
    %v1266 = vadd.f32 %v1265, %v1264
    %v1267 = vstv %s1224
    %v1268 = vmul.f32 %v1267, %v1236
    %v1269 = vadd.f32 %v1266, %v1268
    %v1270 = vstv %s1225
    %v1271 = vmul.f32 %v1270, %v253
    %v1272 = vadd.f32 %v1269, %v1271
    %v1273 = vxor.u32 %v1272, 2147483648
    %v1274 = vmul.f32 %v1273, 1.442695
    %v1275 = vpow.pop %v1274
    %v1276 = vadd.f32 %v1275, 1.0
    %v1277 = vrcp.pop %v1276
    %v1278 = vmul.f32 %v1276, %v1277
    %v1279 = vsub.f32 1.0, %v1278
    %v1280 = vmul.f32 %v1277, %v1279
    %v1281 = vadd.f32 %v1277, %v1280
    %vm1282 = vweird.f32 %v1276
    %vm1283 = vweird.f32 %v1277
    %vm1284 = vmor %vm1282, %vm1283
    %v1285 = vsel %vm1284, %v1277, %v1281
    %v1286 = vand.u32 2147483647, %v1276
    %vm1287 = vcmp.eq.f32.partialorder %v1286, 8.507059e+37
    %v1288 = vand.u32 %v1276, 2147483648
    %v1289 = vor.u32 1.1754944e-38, %v1288
    %v1290 = vsel %vm1287, %v1289, %v1285
    %v1291 = vmul.f32 1.0, %v1290
    %s1292 = scalar_lea.vmem %s10, 4
    %1293 = vst [vmem:[%s1292] sm:$0xf] %v1291
    // Predicated region
    $region42: #{mono_depth_stn_forward.1} parent=1 // pred_check
      _
    $region43: #{mono_depth_stn_forward.1} parent=1 // pred_check_branch
      %1295 = sbr.rel (0) target = $region45
    $region44: #{mono_depth_stn_forward.1} parent=1 // pred_region
      %1297 = vsyncadd [#allocation3], 0
      %s1299 = sshll.u32 [#allocation7], 4
      %s1300 = int_to_ptr.vmem [resolvable:$true] %s1299
      %s1301 = sshll.u32 %s8, 4
      %s1302 = int_to_ptr.hbm [resolvable:$true] %s1301
      %1304 = dma.vmem_to_hbm [thread:$0]  %s1300, 32, %s1302, [#allocation3]
    $region45: #{mono_depth_stn_forward.1} parent=1 // pred_fallthru
      _
    // Predicated region
    $region46: #{mono_depth_stn_forward.1} parent=1 // pred_check
      _
    $region47: #{mono_depth_stn_forward.1} parent=1 // pred_check_branch
      %1306 = sbr.rel (0) target = $region49
    $region48: #{mono_depth_stn_forward.1} parent=1 // pred_region
      %1308 = vsyncadd [#allocation9], 0
      %s1310 = sshll.u32 [#allocation8], 4
      %s1311 = int_to_ptr.vmem [resolvable:$true] %s1310
      %s1312 = sshll.u32 %s9, 4
      %s1313 = int_to_ptr.hbm [resolvable:$true] %s1312
      %1315 = dma.vmem_to_hbm [thread:$0]  %s1311, 32, %s1313, [#allocation9]
    $region49: #{mono_depth_stn_forward.1} parent=1 // pred_fallthru
      _
    // Predicated region
    $region50: #{mono_depth_stn_forward.1} parent=1 // pred_check
      _
    $region51: #{mono_depth_stn_forward.1} parent=1 // pred_check_branch
      %1317 = sbr.rel (0) target = $region53
    $region52: #{mono_depth_stn_forward.1} parent=1 // pred_region
      _
    $region53: #{mono_depth_stn_forward.1} parent=1 // pred_fallthru
      _
    // Predicated region
    $region54: #{mono_depth_stn_forward.1} parent=1 // pred_check
      _
    $region55: #{mono_depth_stn_forward.1} parent=1 // pred_check_branch
      %1319 = sbr.rel (0) target = $region57
    $region56: #{mono_depth_stn_forward.1} parent=1 // pred_region
      %1321 = dma.done [#allocation3], 32
    $region57: #{mono_depth_stn_forward.1} parent=1 // pred_fallthru
      _
    // Predicated region
    $region58: #{mono_depth_stn_forward.1} parent=1 // pred_check
      _
    $region59: #{mono_depth_stn_forward.1} parent=1 // pred_check_branch
      %1323 = sbr.rel (0) target = $region61
    $region60: #{mono_depth_stn_forward.1} parent=1 // pred_region
      %1325 = dma.done [#allocation9], 32
    $region61: #{mono_depth_stn_forward.1} parent=1 // pred_fallthru
      _
    // Predicated region
    $region62: #{mono_depth_stn_forward.1} parent=1 // pred_check
      _
    $region63: #{mono_depth_stn_forward.1} parent=1 // pred_check_branch
      %1327 = sbr.rel (0) target = $region65
    $region64: #{mono_depth_stn_forward.1} parent=1 // pred_region
      _
    $region65: #{mono_depth_stn_forward.1} parent=1 // pred_fallthru
      _
    %1328 = vsyncpa [#allocation3], 1
    %1329 = vsyncpa [#allocation9], 1
    %1330 = vsyncpa [#allocation4], 1
    %1331 = vsyncpa [#allocation6], 1

</llo_original>
